<compile_context>
chip_gen: v7x
topology: tpu7x:2x2x1
jax: 0.10.0
libtpu: 0.0.40
codegen_flags: <defaults>
</compile_context>

<pallas_src>
import jax
import jax.numpy as jnp
from jax.experimental import pallas as pl
from jax.experimental.pallas import tpu as pltpu


_LANE = 128      # TPU lane width
_SUBLANE = 8     # TPU sublane width


def _round_up(n, m):
    return ((n + m - 1) // m) * m


def _pad_axis(x, target, axis):
    pad = target - x.shape[axis]
    if pad <= 0:
        return x
    widths = [(0, 0)] * x.ndim
    widths[axis] = (0, pad)
    return jnp.pad(x, widths)


def _vmem_capacity_bytes():
    try:
        return int(pltpu.get_tpu_info().vmem_capacity_bytes)
    except Exception:
        return 64 << 20      # conservative default: v7x per-TensorCore VMEM


def _mlp_head(x, w1_ref, b1_ref, w2_ref, b2_ref, out_ref, num_classes):
    """relu(x @ w1 + b1) @ w2 + b2, then log_softmax over the real classes."""
    h = jnp.dot(x, w1_ref[...], preferred_element_type=jnp.float32)
    h = jnp.maximum(h + b1_ref[...], 0.0)                       # [Bt, H]
    logits = jnp.dot(h, w2_ref[...], preferred_element_type=jnp.float32)
    logits = logits + b2_ref[...]                               # [Bt, Cp]
    # Numerically stable log_softmax; padded class lanes are masked out so
    # they never affect max / sum.
    col = jax.lax.broadcasted_iota(jnp.int32, logits.shape, 1)
    valid = col < num_classes
    masked = jnp.where(valid, logits, jnp.full_like(logits, -1e30))
    m = jnp.max(masked, axis=1, keepdims=True)
    shifted = masked - m
    expv = jnp.where(valid, jnp.exp(shifted), 0.0)
    lse = jnp.log(jnp.sum(expv, axis=1, keepdims=True))
    out_ref[...] = shifted - lse


def _make_dan_vmem_kernel(seq_len, b_tile, batch, num_classes):
    """Fast path: embedding table resident in VMEM; gather = dynamic slices."""
    inv_s = 1.0 / float(seq_len)

    def kernel(idx_ref,            # SMEM [B_pad*S] int32 (scalar prefetch)
               emb_ref,            # VMEM [V_pad, E_pad] f32 (resident table)
               w1_ref, b1_ref,     # VMEM [E_pad, H_pad], [1, H_pad]
               w2_ref, b2_ref,     # VMEM [H_pad, C_pad], [1, C_pad]
               out_ref,            # VMEM [b_tile, C_pad]
               acc_ref):           # VMEM scratch [b_tile, E_pad]
        t = pl.program_id(0)
        base = t * (b_tile * seq_len)
        valid = jnp.minimum(b_tile, batch - t * b_tile)   # real rows this tile

        acc_ref[...] = jnp.zeros_like(acc_ref)

        @pl.loop(0, b_tile)
        def _(b):
            @pl.when(b < valid)                 # skip padded batch rows
            def _():
                off = base + b * seq_len
                # Static unroll over the sequence: per-token in-VMEM row load
                # + VPU add, one row store per batch element (no per-token RMW).
                row_sum = emb_ref[pl.ds(idx_ref[off], 1), :]
                for s in range(1, seq_len):
                    row_sum = row_sum + emb_ref[pl.ds(idx_ref[off + s], 1), :]
                acc_ref[pl.ds(b, 1), :] = row_sum * inv_s

        _mlp_head(acc_ref[...], w1_ref, b1_ref, w2_ref, b2_ref,
                  out_ref, num_classes)

    return kernel


def _make_dan_hbm_kernel(seq_len, b_tile, batch, num_classes):
    """Fallback: table stays in HBM; per-sequence double-buffered row DMAs."""
    inv_s = 1.0 / float(seq_len)

    def kernel(idx_ref,            # SMEM [B_pad*S] int32 (scalar prefetch)
               emb_hbm,            # ANY  [V_pad, E_pad] f32 (stays in HBM)
               w1_ref, b1_ref, w2_ref, b2_ref,
               out_ref,            # VMEM [b_tile, C_pad]
               acc_ref,            # VMEM scratch [b_tile, E_pad]
               rows_buf,           # VMEM scratch [2*S, E_pad] (double buffer)
               sem):               # DMA semaphores (2,)
        t = pl.program_id(0)
        base = t * (b_tile * seq_len)
        valid = jnp.minimum(b_tile, batch - t * b_tile)

        acc_ref[...] = jnp.zeros_like(acc_ref)

        def issue_seq(b, slot):
            # All seq_len row DMAs for batch element b in flight on sem[slot].
            off = base + b * seq_len
            dst0 = slot * seq_len
            for s in range(seq_len):
                pltpu.make_async_copy(
                    emb_hbm.at[pl.ds(idx_ref[off + s], 1), :],
                    rows_buf.at[pl.ds(dst0 + s, 1), :],
                    sem.at[slot],
                ).start()

        def wait_seq(slot):
            # One wait per issued row copy (byte counts balance on sem[slot]);
            # the source slice is shape-only — the wait is keyed on the sem.
            dst0 = slot * seq_len
            for s in range(seq_len):
                pltpu.make_async_copy(
                    emb_hbm.at[pl.ds(0, 1), :],
                    rows_buf.at[pl.ds(dst0 + s, 1), :],
                    sem.at[slot],
                ).wait()

        issue_seq(0, 0)   # prime: every tile has at least one valid row

        @pl.loop(0, b_tile)
        def _(b):
            slot = b & 1
            # Issue the NEXT sequence before waiting on the current one so the
            # DMA engine stays saturated.  Safe: buffer (1-slot) was last read
            # (reduced) at iteration b-1, strictly before these stores land.
            @pl.when(b + 1 < valid)
            def _():
                issue_seq(b + 1, 1 - slot)

            @pl.when(b < valid)
            def _():
                wait_seq(slot)
                seq_rows = rows_buf[pl.ds(slot * seq_len, seq_len), :]
                acc_ref[pl.ds(b, 1), :] = (
                    jnp.sum(seq_rows, axis=0, keepdims=True) * inv_s)

        _mlp_head(acc_ref[...], w1_ref, b1_ref, w2_ref, b2_ref,
                  out_ref, num_classes)

    return kernel


def dan_forward(word_indices, emb_table, w1, b1, w2, b2, *,
                force_hbm_gather=False):
    """word_indices: int [seq_len, batch]; weights laid out as [in, out]."""
    seq_len, batch = word_indices.shape
    vocab, emb_dim = emb_table.shape
    hidden = w1.shape[1]
    num_classes = w2.shape[1]

    e_pad = _round_up(emb_dim, _LANE)
    h_pad = _round_up(hidden, _LANE)
    c_pad = _round_up(num_classes, _LANE)
    v_pad = _round_up(vocab, _SUBLANE)

    # Batch tiling: aim for >=2 tiles (so both v7x TensorCores get work) and
    # cap the tile at 256 rows (matches the 256-wide MXU on v6e/v7x).
    b_tile = min(256, _round_up(max((batch + 1) // 2, 1), _SUBLANE))
    b_pad = _round_up(batch, b_tile)
    n_tiles = b_pad // b_tile

    # Indices: [S, B] -> [B_pad, S] -> flat [B_pad*S] (batch-major) for SMEM.
    # Clamp so an out-of-range token can never trigger an OOB gather / DMA.
    idx_bs = jnp.clip(word_indices.astype(jnp.int32), 0, vocab - 1).T
    idx_bs = _pad_axis(idx_bs, b_pad, 0)
    idx_flat = idx_bs.reshape(-1)

    # Zero-pad operands to lane-dense / MXU-friendly shapes.
    emb_p = _pad_axis(_pad_axis(emb_table.astype(jnp.float32), e_pad, 1), v_pad, 0)
    w1_p = _pad_axis(_pad_axis(w1.astype(jnp.float32), e_pad, 0), h_pad, 1)
    b1_p = _pad_axis(jnp.asarray(b1, jnp.float32).reshape(1, -1), h_pad, 1)
    w2_p = _pad_axis(_pad_axis(w2.astype(jnp.float32), h_pad, 0), c_pad, 1)
    b2_p = _pad_axis(jnp.asarray(b2, jnp.float32).reshape(1, -1), c_pad, 1)

    # Generation-aware VMEM budget for the table-in-VMEM fast path.
    f32b = 4
    weight_bytes = (e_pad * h_pad + h_pad + h_pad * c_pad + c_pad) * f32b
    table_bytes = v_pad * e_pad * f32b
    out_bytes = b_tile * c_pad * f32b
    acc_bytes = b_tile * e_pad * f32b
    # Assume every BlockSpec operand may be double-buffered by the pipeline.
    fast_need = 2 * (table_bytes + weight_bytes + out_bytes) + acc_bytes + (2 << 20)
    vmem_cap = _vmem_capacity_bytes()
    use_vmem_table = (not force_hbm_gather) and fast_need <= int(0.75 * vmem_cap)

    common_w_specs = [
        pl.BlockSpec((e_pad, h_pad), lambda t, idx: (0, 0)),    # w1
        pl.BlockSpec((1, h_pad), lambda t, idx: (0, 0)),        # b1
        pl.BlockSpec((h_pad, c_pad), lambda t, idx: (0, 0)),    # w2
        pl.BlockSpec((1, c_pad), lambda t, idx: (0, 0)),        # b2
    ]
    out_spec = pl.BlockSpec((b_tile, c_pad), lambda t, idx: (t, 0))

    if use_vmem_table:
        kernel = _make_dan_vmem_kernel(seq_len, b_tile, batch, num_classes)
        grid_spec = pltpu.PrefetchScalarGridSpec(
            num_scalar_prefetch=1,
            grid=(n_tiles,),
            in_specs=[pl.BlockSpec((v_pad, e_pad), lambda t, idx: (0, 0))]
                     + common_w_specs,
            out_specs=out_spec,
            scratch_shapes=[pltpu.VMEM((b_tile, e_pad), jnp.float32)],
        )
        vmem_limit = fast_need
    else:
        kernel = _make_dan_hbm_kernel(seq_len, b_tile, batch, num_classes)
        grid_spec = pltpu.PrefetchScalarGridSpec(
            num_scalar_prefetch=1,
            grid=(n_tiles,),
            in_specs=[pl.BlockSpec(memory_space=pl.ANY)] + common_w_specs,
            out_specs=out_spec,
            scratch_shapes=[
                pltpu.VMEM((b_tile, e_pad), jnp.float32),
                pltpu.VMEM((2 * seq_len, e_pad), jnp.float32),
                pltpu.SemaphoreType.DMA((2,)),
            ],
        )
        vmem_limit = (2 * (weight_bytes + out_bytes) + acc_bytes
                      + 2 * seq_len * e_pad * f32b + (2 << 20))

    vmem_limit = int(min(max(vmem_limit, 32 << 20), int(0.95 * vmem_cap)))

    out = pl.pallas_call(
        kernel,
        out_shape=jax.ShapeDtypeStruct((b_pad, c_pad), jnp.float32),
        grid_spec=grid_spec,
        compiler_params=pltpu.CompilerParams(
            dimension_semantics=("parallel",),   # batch tiles -> both TCs on v7x
            vmem_limit_bytes=vmem_limit,
        ),
    )(idx_flat, emb_p, w1_p, b1_p, w2_p, b2_p)

    return out[:batch, :num_classes]


def reference_forward(word_indices, emb_table, w1, b1, w2, b2):
    x = emb_table[word_indices]                       # [S, B, E]
    x = jnp.mean(x, axis=0)                           # [B, E]
    h = jnp.maximum(x @ w1 + b1.reshape(1, -1), 0.0)  # [B, H]
    logits = h @ w2 + b2.reshape(1, -1)               # [B, C]
    return jax.nn.log_softmax(logits, axis=1)


if __name__ == "__main__":
    # TODO(synk): the real model reads GloVe embeddings from
    # data/glove.6B.300d-relativized.txt; we use a deterministic random table
    # with identical forward semantics (no file or network access).
    vocab_size = 64          # stand-in for the GloVe-relativized vocab
    input_size = 32          # embedding dim (300 in the real model)
    hidden_size = 32
    num_classes = 2
    seq_len, batch = 8, 4

    key = jax.random.PRNGKey(0)
    k_idx, k_emb, k_w1, k_b1, k_w2, k_b2 = jax.random.split(key, 6)

    word_indices = jax.random.randint(k_idx, (seq_len, batch), 0, vocab_size,
                                      dtype=jnp.int32)
    emb_table = jax.random.normal(k_emb, (vocab_size, input_size), jnp.float32) * 0.1
    # note: PyTorch nn.Linear stores weight as [out, in]; we keep [in, out].
    w1 = jax.random.normal(k_w1, (input_size, hidden_size), jnp.float32) * 0.1
    b1 = jax.random.normal(k_b1, (hidden_size,), jnp.float32) * 0.1
    w2 = jax.random.normal(k_w2, (hidden_size, num_classes), jnp.float32) * 0.1
    b2 = jax.random.normal(k_b2, (num_classes,), jnp.float32) * 0.1

    ref = reference_forward(word_indices, emb_table, w1, b1, w2, b2)

    # Fast path: embedding table resident in VMEM, in-VMEM dynamic-slice gather.
    out_fast = jax.block_until_ready(
        dan_forward(word_indices, emb_table, w1, b1, w2, b2))
    assert out_fast.shape == (batch, num_classes), out_fast.shape
    assert jnp.allclose(out_fast, ref, atol=2e-5, rtol=2e-5), (out_fast, ref)

    # Fallback path: table stays in HBM; per-sequence double-buffered row DMAs.
    out_hbm = jax.block_until_ready(
        dan_forward(word_indices, emb_table, w1, b1, w2, b2,
                    force_hbm_gather=True))
    assert out_hbm.shape == (batch, num_classes), out_hbm.shape
    assert jnp.allclose(out_hbm, ref, atol=2e-5, rtol=2e-5), (out_hbm, ref)

    print("KERNEL_OK")
</pallas_src>

<mosaic_0001>
module attributes {stable_mosaic.version = 11 : i64} {
  func.func @kernel(%arg0: i32, %arg1: memref<64xi32, #tpu.memory_space<smem>>, %arg2: memref<64x128xf32, #tpu.memory_space<vmem>>, %arg3: memref<128x128xf32, #tpu.memory_space<vmem>>, %arg4: memref<1x128xf32, #tpu.memory_space<vmem>>, %arg5: memref<128x128xf32, #tpu.memory_space<vmem>>, %arg6: memref<1x128xf32, #tpu.memory_space<vmem>>, %arg7: memref<8x128xf32, #tpu.memory_space<vmem>>, %arg8: memref<8x128xf32, #tpu.memory_space<vmem>>) attributes {dimension_semantics = [#tpu.dimension_semantics<parallel>], iteration_bounds = array<i64: 1>, scalar_prefetch = 1 : i64, scratch_operands = 1 : i64, tpu.core_type = #tpu.core_type<tc>, window_params = [{pipeline_mode = #tpu.pipeline_mode<synchronous>, transform_indices = @transform_0, window_bounds = array<i64: 64, 128>}, {pipeline_mode = #tpu.pipeline_mode<synchronous>, transform_indices = @transform_1, window_bounds = array<i64: 128, 128>}, {pipeline_mode = #tpu.pipeline_mode<synchronous>, transform_indices = @transform_2, window_bounds = array<i64: 1, 128>}, {pipeline_mode = #tpu.pipeline_mode<synchronous>, transform_indices = @transform_3, window_bounds = array<i64: 128, 128>}, {pipeline_mode = #tpu.pipeline_mode<synchronous>, transform_indices = @transform_4, window_bounds = array<i64: 1, 128>}, {transform_indices = @transform_5, window_bounds = array<i64: 8, 128>}]} {
    %c64_i32 = arith.constant 64 : i32
    %0 = arith.muli %arg0, %c64_i32 : i32
    %c8_i32 = arith.constant 8 : i32
    %1 = arith.muli %arg0, %c8_i32 : i32
    %c4_i32 = arith.constant 4 : i32
    %2 = arith.subi %c4_i32, %1 : i32
    %c8_i32_0 = arith.constant 8 : i32
    %3 = arith.minsi %c8_i32_0, %2 : i32
    %cst = arith.constant 0.000000e+00 : f32
    %4 = vector.broadcast %cst : f32 to vector<8x128xf32>
    %c0 = arith.constant 0 : index
    %c0_1 = arith.constant 0 : index
    %5 = vector.load %arg8[%c0, %c0_1] : memref<8x128xf32, #tpu.memory_space<vmem>>, vector<8x128xf32>
    tpu.vector_store %arg8[%c0, %c0_1], %4 {strides = array<i32>} : memref<8x128xf32, #tpu.memory_space<vmem>>, vector<8x128xf32>,
    %c0_i32 = arith.constant 0 : i32
    %c8_i32_2 = arith.constant 8 : i32
    %6 = arith.addi %c0_i32, %c8_i32_2 : i32
    %c1_i32 = arith.constant 1 : i32
    scf.for %arg9 = %c0_i32 to %6 step %c1_i32  : i32 {
      %c1_i32_23 = arith.constant 1 : i32
      %38 = arith.muli %arg9, %c1_i32_23 : i32
      %c0_i32_24 = arith.constant 0 : i32
      %39 = arith.addi %c0_i32_24, %38 : i32
      %40 = arith.cmpi slt, %39, %3 : i32
      %41 = arith.extui %40 : i1 to i32
      %c0_i32_25 = arith.constant 0 : i32
      %42 = arith.cmpi ne, %41, %c0_i32_25 : i32
      scf.if %42 {
        %c8_i32_26 = arith.constant 8 : i32
        %43 = arith.muli %39, %c8_i32_26 : i32
        %44 = arith.addi %0, %43 : i32
        %45 = arith.index_cast %44 : i32 to index
        %46 = memref.load %arg1[%45] : memref<64xi32, #tpu.memory_space<smem>>
        %47 = arith.index_cast %46 : i32 to index
        %c0_27 = arith.constant 0 : index
        %48 = vector.load %arg2[%47, %c0_27] : memref<64x128xf32, #tpu.memory_space<vmem>>, vector<1x128xf32>
        %c1_i32_28 = arith.constant 1 : i32
        %49 = arith.addi %44, %c1_i32_28 : i32
        %50 = arith.index_cast %49 : i32 to index
        %51 = memref.load %arg1[%50] : memref<64xi32, #tpu.memory_space<smem>>
        %52 = arith.index_cast %51 : i32 to index
        %c0_29 = arith.constant 0 : index
        %53 = vector.load %arg2[%52, %c0_29] : memref<64x128xf32, #tpu.memory_space<vmem>>, vector<1x128xf32>
        %54 = arith.addf %48, %53 : vector<1x128xf32>
        %c2_i32_30 = arith.constant 2 : i32
        %55 = arith.addi %44, %c2_i32_30 : i32
        %56 = arith.index_cast %55 : i32 to index
        %57 = memref.load %arg1[%56] : memref<64xi32, #tpu.memory_space<smem>>
        %58 = arith.index_cast %57 : i32 to index
        %c0_31 = arith.constant 0 : index
        %59 = vector.load %arg2[%58, %c0_31] : memref<64x128xf32, #tpu.memory_space<vmem>>, vector<1x128xf32>
        %60 = arith.addf %54, %59 : vector<1x128xf32>
        %c3_i32 = arith.constant 3 : i32
        %61 = arith.addi %44, %c3_i32 : i32
        %62 = arith.index_cast %61 : i32 to index
        %63 = memref.load %arg1[%62] : memref<64xi32, #tpu.memory_space<smem>>
        %64 = arith.index_cast %63 : i32 to index
        %c0_32 = arith.constant 0 : index
        %65 = vector.load %arg2[%64, %c0_32] : memref<64x128xf32, #tpu.memory_space<vmem>>, vector<1x128xf32>
        %66 = arith.addf %60, %65 : vector<1x128xf32>
        %c4_i32_33 = arith.constant 4 : i32
        %67 = arith.addi %44, %c4_i32_33 : i32
        %68 = arith.index_cast %67 : i32 to index
        %69 = memref.load %arg1[%68] : memref<64xi32, #tpu.memory_space<smem>>
        %70 = arith.index_cast %69 : i32 to index
        %c0_34 = arith.constant 0 : index
        %71 = vector.load %arg2[%70, %c0_34] : memref<64x128xf32, #tpu.memory_space<vmem>>, vector<1x128xf32>
        %72 = arith.addf %66, %71 : vector<1x128xf32>
        %c5_i32 = arith.constant 5 : i32
        %73 = arith.addi %44, %c5_i32 : i32
        %74 = arith.index_cast %73 : i32 to index
        %75 = memref.load %arg1[%74] : memref<64xi32, #tpu.memory_space<smem>>
        %76 = arith.index_cast %75 : i32 to index
        %c0_35 = arith.constant 0 : index
        %77 = vector.load %arg2[%76, %c0_35] : memref<64x128xf32, #tpu.memory_space<vmem>>, vector<1x128xf32>
        %78 = arith.addf %72, %77 : vector<1x128xf32>
        %c6_i32 = arith.constant 6 : i32
        %79 = arith.addi %44, %c6_i32 : i32
        %80 = arith.index_cast %79 : i32 to index
        %81 = memref.load %arg1[%80] : memref<64xi32, #tpu.memory_space<smem>>
        %82 = arith.index_cast %81 : i32 to index
        %c0_36 = arith.constant 0 : index
        %83 = vector.load %arg2[%82, %c0_36] : memref<64x128xf32, #tpu.memory_space<vmem>>, vector<1x128xf32>
        %84 = arith.addf %78, %83 : vector<1x128xf32>
        %c7_i32 = arith.constant 7 : i32
        %85 = arith.addi %44, %c7_i32 : i32
        %86 = arith.index_cast %85 : i32 to index
        %87 = memref.load %arg1[%86] : memref<64xi32, #tpu.memory_space<smem>>
        %88 = arith.index_cast %87 : i32 to index
        %c0_37 = arith.constant 0 : index
        %89 = vector.load %arg2[%88, %c0_37] : memref<64x128xf32, #tpu.memory_space<vmem>>, vector<1x128xf32>
        %90 = arith.addf %84, %89 : vector<1x128xf32>
        %cst_38 = arith.constant 1.250000e-01 : f32
        %91 = vector.broadcast %cst_38 : f32 to vector<1x128xf32>
        %92 = arith.mulf %90, %91 : vector<1x128xf32>
        %93 = arith.index_cast %39 : i32 to index
        %c0_39 = arith.constant 0 : index
        %94 = vector.load %arg8[%93, %c0_39] : memref<8x128xf32, #tpu.memory_space<vmem>>, vector<1x128xf32>
        tpu.vector_store %arg8[%93, %c0_39], %92 {strides = array<i32>} : memref<8x128xf32, #tpu.memory_space<vmem>>, vector<1x128xf32>,
      } else {
      }
    }
    %c8_i32_3 = arith.constant 8 : i32
    %c0_4 = arith.constant 0 : index
    %c0_5 = arith.constant 0 : index
    %7 = vector.load %arg8[%c0_4, %c0_5] : memref<8x128xf32, #tpu.memory_space<vmem>>, vector<8x128xf32>
    %c0_6 = arith.constant 0 : index
    %c0_7 = arith.constant 0 : index
    %8 = vector.load %arg3[%c0_6, %c0_7] : memref<128x128xf32, #tpu.memory_space<vmem>>, vector<128x128xf32>
    %cst_8 = arith.constant dense<0.000000e+00> : vector<8x128xf32>
    %9 = tpu.matmul %7, %8, %cst_8 {dimension_numbers = #tpu.dot_dimension_numbers<[1], [0], [0], [1], [0, 0, 1, 1], [], []>} : vector<8x128xf32>, vector<128x128xf32>, vector<8x128xf32> -> vector<8x128xf32>
    %c0_9 = arith.constant 0 : index
    %c0_10 = arith.constant 0 : index
    %10 = vector.load %arg4[%c0_9, %c0_10] : memref<1x128xf32, #tpu.memory_space<vmem>>, vector<1x128xf32>
    %11 = vector.broadcast %10 : vector<1x128xf32> to vector<8x128xf32>
    %12 = arith.addf %9, %11 : vector<8x128xf32>
    %cst_11 = arith.constant 0.000000e+00 : f32
    %13 = vector.broadcast %cst_11 : f32 to vector<8x128xf32>
    %14 = arith.maximumf %12, %13 : vector<8x128xf32>
    %c0_12 = arith.constant 0 : index
    %c0_13 = arith.constant 0 : index
    %15 = vector.load %arg5[%c0_12, %c0_13] : memref<128x128xf32, #tpu.memory_space<vmem>>, vector<128x128xf32>
    %cst_14 = arith.constant dense<0.000000e+00> : vector<8x128xf32>
    %16 = tpu.matmul %14, %15, %cst_14 {dimension_numbers = #tpu.dot_dimension_numbers<[1], [0], [0], [1], [0, 0, 1, 1], [], []>} : vector<8x128xf32>, vector<128x128xf32>, vector<8x128xf32> -> vector<8x128xf32>
    %c0_15 = arith.constant 0 : index
    %c0_16 = arith.constant 0 : index
    %17 = vector.load %arg6[%c0_15, %c0_16] : memref<1x128xf32, #tpu.memory_space<vmem>>, vector<1x128xf32>
    %18 = vector.broadcast %17 : vector<1x128xf32> to vector<8x128xf32>
    %19 = arith.addf %16, %18 : vector<8x128xf32>
    %20 = tpu.iota {dimensions = array<i32: 1>} : vector<8x128xi32>
    %c2_i32 = arith.constant 2 : i32
    %21 = vector.broadcast %c2_i32 : i32 to vector<8x128xi32>
    %22 = arith.cmpi slt, %20, %21 : vector<8x128xi32>
    %cst_17 = arith.constant -1.000000e+30 : f32
    %23 = vector.broadcast %cst_17 : f32 to vector<8x128xf32>
    %24 = arith.select %22, %19, %23 : vector<8x128xi1>, vector<8x128xf32>
    %cst_18 = arith.constant dense<0xFF800000> : vector<8xf32>
    %25 = vector.multi_reduction <maximumf>, %24, %cst_18 [1] : vector<8x128xf32> to vector<8xf32>
    %26 = vector.shape_cast %25 : vector<8xf32> to vector<8x1xf32>
    %27 = vector.broadcast %26 : vector<8x1xf32> to vector<8x128xf32>
    %28 = arith.subf %24, %27 : vector<8x128xf32>
    %29 = math.exp %28 : vector<8x128xf32>
    %cst_19 = arith.constant 0.000000e+00 : f32
    %30 = vector.broadcast %cst_19 : f32 to vector<8x128xf32>
    %31 = arith.select %22, %29, %30 : vector<8x128xi1>, vector<8x128xf32>
    %cst_20 = arith.constant dense<0.000000e+00> : vector<8xf32>
    %32 = vector.multi_reduction <add>, %31, %cst_20 [1] : vector<8x128xf32> to vector<8xf32>
    %33 = vector.shape_cast %32 : vector<8xf32> to vector<8x1xf32>
    %34 = math.log %33 : vector<8x1xf32>
    %35 = vector.broadcast %34 : vector<8x1xf32> to vector<8x128xf32>
    %36 = arith.subf %28, %35 : vector<8x128xf32>
    %c0_21 = arith.constant 0 : index
    %c0_22 = arith.constant 0 : index
    %37 = vector.load %arg7[%c0_21, %c0_22] : memref<8x128xf32, #tpu.memory_space<vmem>>, vector<8x128xf32>
    tpu.vector_store %arg7[%c0_21, %c0_22], %36 {strides = array<i32>} : memref<8x128xf32, #tpu.memory_space<vmem>>, vector<8x128xf32>,
    return
  }
  func.func @transform_0(%arg0: i32, %arg1: memref<64xi32, #tpu.memory_space<smem>>) -> (i32, i32) {
    %c0_i32 = arith.constant 0 : i32
    %c0_i32_0 = arith.constant 0 : i32
    %c0_i32_1 = arith.constant 0 : i32
    return %c0_i32, %c0_i32_0 : i32, i32
  }
  func.func @transform_1(%arg0: i32, %arg1: memref<64xi32, #tpu.memory_space<smem>>) -> (i32, i32) {
    %c0_i32 = arith.constant 0 : i32
    %c0_i32_0 = arith.constant 0 : i32
    %c0_i32_1 = arith.constant 0 : i32
    return %c0_i32, %c0_i32_0 : i32, i32
  }
  func.func @transform_2(%arg0: i32, %arg1: memref<64xi32, #tpu.memory_space<smem>>) -> (i32, i32) {
    %c0_i32 = arith.constant 0 : i32
    %c0_i32_0 = arith.constant 0 : i32
    %c0_i32_1 = arith.constant 0 : i32
    return %c0_i32, %c0_i32_0 : i32, i32
  }
  func.func @transform_3(%arg0: i32, %arg1: memref<64xi32, #tpu.memory_space<smem>>) -> (i32, i32) {
    %c0_i32 = arith.constant 0 : i32
    %c0_i32_0 = arith.constant 0 : i32
    %c0_i32_1 = arith.constant 0 : i32
    return %c0_i32, %c0_i32_0 : i32, i32
  }
  func.func @transform_4(%arg0: i32, %arg1: memref<64xi32, #tpu.memory_space<smem>>) -> (i32, i32) {
    %c0_i32 = arith.constant 0 : i32
    %c0_i32_0 = arith.constant 0 : i32
    %c0_i32_1 = arith.constant 0 : i32
    return %c0_i32, %c0_i32_0 : i32, i32
  }
  func.func @transform_5(%arg0: i32, %arg1: memref<64xi32, #tpu.memory_space<smem>>) -> (i32, i32) {
    %c0_i32 = arith.constant 0 : i32
    %c0_i32_0 = arith.constant 0 : i32
    return %arg0, %c0_i32 : i32, i32
  }
}

</mosaic_0001>

<llo_original>
// kernel: tpu_custom_call.1
$region0: #{tpu_custom_call.1}
  #allocation0 [shape = 'u32[]', space=smem, size = 0x4, offset = 0x4, fixed_abs, tag = 'smem constant byte address 0x4 - core index']
  #allocation1 [shape = 'u32[144,128]{1,0:T(1,128)}', space=vmem, size = 0x12000, scoped, tag = 'internal scratch']
  #allocation2 [shape = 'f32[8,128]{1,0:T(8,128)}', space=vmem, size = 0x1000, scoped, tag = 'scratch operand']
  #allocation3 [shape = 's32[1]{0}', space=sflag, size = 0x4, scoped, tag = 'scoped memory for tpu_custom_call.1']
  #allocation4 [shape = 'u8[512]{0}', space=smem, size = 0x200, scoped, tag = 'prefetched SMEM operand 0']
  %s0 = inlined_call_operand.hbm [shape: s32[64], index: 0, kind: input, shape index: {}]
  %s1 = inlined_call_operand.hbm [shape: f32[64,128], index: 1, kind: input, shape index: {}]
  %s2 = inlined_call_operand.hbm [shape: f32[128,128], index: 2, kind: input, shape index: {}]
  %s3 = inlined_call_operand.vmem [shape: f32[1,128], index: 3, kind: input, shape index: {}]
  %s4 = inlined_call_operand.hbm [shape: f32[128,128], index: 4, kind: input, shape index: {}]
  %s5 = inlined_call_operand.vmem [shape: f32[1,128], index: 5, kind: input, shape index: {}]
  %s6 = inlined_call_operand.hbm [shape: f32[8,128], index: 6, kind: output, shape index: {}]
  %s7 = sld [smem:[#allocation0]]
  $region53: #{tpu_custom_call.1} parent=0
    _
  %s9 = ssub.s32 1, %s7
  %s10 = scalar_select 0, %s9, %s7
  %12 = dma.hbm_to_smem %s0, 16, [#allocation4], [#allocation3]
  %13 = dma.done [#allocation3], 16
  %14 = sfence
  $region1: #{tpu_custom_call.1} parent=0
    #allocation5 [shape = 'u8[32768]{0}', space=vmem, size = 0x8000, scoped, tag = 'input window, operand 1, single buffered']
    #allocation6 [shape = 's32[1]{0}', space=sflag, size = 0x4, scoped, tag = 'scoped memory for tpu_custom_call.1']
    #allocation7 [shape = 's32[1]{0}', space=sflag, size = 0x4, scoped, tag = 'scoped memory for tpu_custom_call.1']
    #allocation8 [shape = 'u8[65536]{0}', space=vmem, size = 0x10000, scoped, tag = 'input window, operand 2, single buffered']
    #allocation9 [shape = 's32[1]{0}', space=sflag, size = 0x4, scoped, tag = 'scoped memory for tpu_custom_call.1']
    #allocation10 [shape = 'u8[65536]{0}', space=vmem, size = 0x10000, scoped, tag = 'input window, operand 4, single buffered']
    #allocation11 [shape = 'u8[4096]{0}', space=vmem, size = 0x1000, scoped, tag = 'output window, operand 0, single buffered']
    %15 = vsyncpa [#allocation6], 0
    %16 = vsyncpa [#allocation9], 0
    %17 = vsyncpa [#allocation7], 0
    // Predicated region
    $region2: #{tpu_custom_call.1} parent=1 // pred_check
      _
    $region3: #{tpu_custom_call.1} parent=1 // pred_check_branch
      %19 = sbr.rel (0) target = $region5
    $region4: #{tpu_custom_call.1} parent=1 // pred_region
      %s21 = ssub.s32 1024, 1024
      %22 = vsyncadd [#allocation6], %s21
      %s23 = sshll.u32 [#allocation5], 4
      %s24 = int_to_ptr.vmem [resolvable:$true] %s23
      %29 = dma.hbm_to_vmem [thread:$0]  %s1, 1024, %s24, [#allocation6], 128, 128, 8
    $region5: #{tpu_custom_call.1} parent=1 // pred_fallthru
      _
    // Predicated region
    $region6: #{tpu_custom_call.1} parent=1 // pred_check
      _
    $region7: #{tpu_custom_call.1} parent=1 // pred_check_branch
      %31 = sbr.rel (0) target = $region9
    $region8: #{tpu_custom_call.1} parent=1 // pred_region
      %s33 = ssub.s32 2048, 2048
      %34 = vsyncadd [#allocation9], %s33
      %s35 = sshll.u32 [#allocation8], 4
      %s36 = int_to_ptr.vmem [resolvable:$true] %s35
      %41 = dma.hbm_to_vmem [thread:$0]  %s2, 2048, %s36, [#allocation9], 128, 128, 8
    $region9: #{tpu_custom_call.1} parent=1 // pred_fallthru
      _
    // Predicated region
    $region10: #{tpu_custom_call.1} parent=1 // pred_check
      _
    $region11: #{tpu_custom_call.1} parent=1 // pred_check_branch
      %43 = sbr.rel (0) target = $region13
    $region12: #{tpu_custom_call.1} parent=1 // pred_region
      _
    $region13: #{tpu_custom_call.1} parent=1 // pred_fallthru
      _
    // Predicated region
    $region14: #{tpu_custom_call.1} parent=1 // pred_check
      _
    $region15: #{tpu_custom_call.1} parent=1 // pred_check_branch
      %45 = sbr.rel (0) target = $region17
    $region16: #{tpu_custom_call.1} parent=1 // pred_region
      %s47 = ssub.s32 2048, 2048
      %48 = vsyncadd [#allocation9], %s47
      %s49 = sshll.u32 [#allocation10], 4
      %s50 = int_to_ptr.vmem [resolvable:$true] %s49
      %55 = dma.hbm_to_vmem [thread:$0]  %s4, 2048, %s50, [#allocation9], 128, 128, 8
    $region17: #{tpu_custom_call.1} parent=1 // pred_fallthru
      _
    // Predicated region
    $region18: #{tpu_custom_call.1} parent=1 // pred_check
      _
    $region19: #{tpu_custom_call.1} parent=1 // pred_check_branch
      %57 = sbr.rel (0) target = $region21
    $region20: #{tpu_custom_call.1} parent=1 // pred_region
      _
    $region21: #{tpu_custom_call.1} parent=1 // pred_fallthru
      _
    // Predicated region
    $region22: #{tpu_custom_call.1} parent=1 // pred_check
      _
    $region23: #{tpu_custom_call.1} parent=1 // pred_check_branch
      %59 = sbr.rel (0) target = $region25
    $region24: #{tpu_custom_call.1} parent=1 // pred_region
      %60 = dma.done [#allocation6], 1024
    $region25: #{tpu_custom_call.1} parent=1 // pred_fallthru
      _
    // Predicated region
    $region26: #{tpu_custom_call.1} parent=1 // pred_check
      _
    $region27: #{tpu_custom_call.1} parent=1 // pred_check_branch
      %62 = sbr.rel (0) target = $region29
    $region28: #{tpu_custom_call.1} parent=1 // pred_region
      %63 = dma.done [#allocation9], 2048
    $region29: #{tpu_custom_call.1} parent=1 // pred_fallthru
      _
    // Predicated region
    $region30: #{tpu_custom_call.1} parent=1 // pred_check
      _
    $region31: #{tpu_custom_call.1} parent=1 // pred_check_branch
      %65 = sbr.rel (0) target = $region33
    $region32: #{tpu_custom_call.1} parent=1 // pred_region
      %66 = dma.done [#allocation9], 2048
    $region33: #{tpu_custom_call.1} parent=1 // pred_fallthru
      _
    %s67 = smul.u32 0, 64
    %s68 = smul.u32 0, 8
    %s69 = ssub.s32 4, %s68
    %p70 = scmp.lt.s32.totalorder %s69, 8
    %s71 = scalar_select %p70, %s69, 8
    %72 = vst [vmem:[#allocation2] sm:$0xff] 0.0
    loop: start=0, step=1, limit=8
    $region34: #{tpu_custom_call.1} parent=1 // loop_pre_header
      _
    $region35: #{tpu_custom_call.1} parent=1 // loop_header
      %s74 = sphi 0, %s78
      %p75 = scmp.ge.s32.totalorder %s74, 8
    $region36: #{tpu_custom_call.1} parent=1 // loop_header_branch
      %77 = sbr.rel (%p75) target = $region40
    $region37: #{tpu_custom_call.1} parent=1 // loop_body
      %p79 = scmp.lt.s32.totalorder %s74, %s71
      // Predicated region
      $region41: #{tpu_custom_call.1} parent=37 // pred_check
        %p80 = pneg %p79
      $region42: #{tpu_custom_call.1} parent=37 // pred_check_branch
        %82 = sbr.rel (%p80) target = $region44
      $region43: #{tpu_custom_call.1} parent=37 // pred_region
        %s83 = smul.u32 %s74, 8
        %s84 = sadd.s32 %s67, %s83
        %s85 = sld [smem:[#allocation4 + %s84]]
        %s86 = scalar_lea.vmem [#allocation5], %s85
        %v87 = vld [vmem:[%s86] sm:$0x1]
        %s88 = sadd.s32 %s84, 1
        %s89 = sld [smem:[#allocation4 + %s88]]
        %s90 = scalar_lea.vmem [#allocation5], %s89
        %v91 = vld [vmem:[%s90] sm:$0x1]
        %v92 = vadd.f32 %v87, %v91
        %s93 = sadd.s32 %s84, 2
        %s94 = sld [smem:[#allocation4 + %s93]]
        %s95 = scalar_lea.vmem [#allocation5], %s94
        %v96 = vld [vmem:[%s95] sm:$0x1]
        %v97 = vadd.f32 %v92, %v96
        %s98 = sadd.s32 %s84, 3
        %s99 = sld [smem:[#allocation4 + %s98]]
        %s100 = scalar_lea.vmem [#allocation5], %s99
        %v101 = vld [vmem:[%s100] sm:$0x1]
        %v102 = vadd.f32 %v97, %v101
        %s103 = sadd.s32 %s84, 4
        %s104 = sld [smem:[#allocation4 + %s103]]
        %s105 = scalar_lea.vmem [#allocation5], %s104
        %v106 = vld [vmem:[%s105] sm:$0x1]
        %v107 = vadd.f32 %v102, %v106
        %s108 = sadd.s32 %s84, 5
        %s109 = sld [smem:[#allocation4 + %s108]]
        %s110 = scalar_lea.vmem [#allocation5], %s109
        %v111 = vld [vmem:[%s110] sm:$0x1]
        %v112 = vadd.f32 %v107, %v111
        %s113 = sadd.s32 %s84, 6
        %s114 = sld [smem:[#allocation4 + %s113]]
        %s115 = scalar_lea.vmem [#allocation5], %s114
        %v116 = vld [vmem:[%s115] sm:$0x1]
        %v117 = vadd.f32 %v112, %v116
        %s118 = sadd.s32 %s84, 7
        %s119 = sld [smem:[#allocation4 + %s118]]
        %s120 = scalar_lea.vmem [#allocation5], %s119
        %v121 = vld [vmem:[%s120] sm:$0x1]
        %v122 = vadd.f32 %v117, %v121
        %v123 = vmul.f32 %v122, 0.125
        %s124 = scalar_lea.vmem [#allocation2], %s74
        %125 = vst [vmem:[%s124] sm:$0x1] %v123
      $region44: #{tpu_custom_call.1} parent=37 // pred_fallthru
        _
    $region38: #{tpu_custom_call.1} parent=1 // loop_footer
      %s78 = sadd.s32 1, %s74
    $region39: #{tpu_custom_call.1} parent=1 // loop_footer_branch
      %73 = sbr.rel target = $region35
    $region40: #{tpu_custom_call.1} parent=1 // loop_exit
      _
    %v126 = vld [vmem:[#allocation2] sm:$0xff]
    %v127 = vld [vmem:[#allocation8] sm:$0xff]
    %v128 = vld [vmem:[#allocation8 + $0x8] sm:$0xff]
    %v129 = vld [vmem:[#allocation8 + $0x10] sm:$0xff]
    %v130 = vld [vmem:[#allocation8 + $0x18] sm:$0xff]
    %v131 = vld [vmem:[#allocation8 + $0x20] sm:$0xff]
    %v132 = vld [vmem:[#allocation8 + $0x28] sm:$0xff]
    %v133 = vld [vmem:[#allocation8 + $0x30] sm:$0xff]
    %v134 = vld [vmem:[#allocation8 + $0x38] sm:$0xff]
    %v135 = vld [vmem:[#allocation8 + $0x40] sm:$0xff]
    %v136 = vld [vmem:[#allocation8 + $0x48] sm:$0xff]
    %v137 = vld [vmem:[#allocation8 + $0x50] sm:$0xff]
    %v138 = vld [vmem:[#allocation8 + $0x58] sm:$0xff]
    %v139 = vld [vmem:[#allocation8 + $0x60] sm:$0xff]
    %v140 = vld [vmem:[#allocation8 + $0x68] sm:$0xff]
    %v141 = vld [vmem:[#allocation8 + $0x70] sm:$0xff]
    %v142 = vld [vmem:[#allocation8 + $0x78] sm:$0xff]
    %v143 = vld [vmem:[%s3] sm:$0x1]
    %v145 = vlaneseq
    %v146 = vshrl.u32 %v145, 7
    %v147 = vsub.s32 0, %v146
    %v148 = vrot.slane %v143, %v147
    %150 = vmatprep.subr.mxu0 0.0
    %151 = vmatpush1.msra.mxu0 %v127
    %152 = vmatprep.subr.mxu0 0.0
    %153 = vmatpush1.msra.mxu0 %v128
    %154 = vmatprep.subr.mxu0 0.0
    %155 = vmatpush1.msra.mxu0 %v129
    %156 = vmatprep.subr.mxu0 0.0
    %157 = vmatpush1.msra.mxu0 %v130
    %158 = vmatprep.subr.mxu0 0.0
    %159 = vmatpush1.msra.mxu0 %v131
    %160 = vmatprep.subr.mxu0 0.0
    %161 = vmatpush1.msra.mxu0 %v132
    %162 = vmatprep.subr.mxu0 0.0
    %163 = vmatpush1.msra.mxu0 %v133
    %164 = vmatprep.subr.mxu0 0.0
    %165 = vmatpush1.msra.mxu0 %v134
    %166 = vmatprep.subr.mxu0 0.0
    %167 = vmatpush1.msra.mxu0 %v135
    %168 = vmatprep.subr.mxu0 0.0
    %169 = vmatpush1.msra.mxu0 %v136
    %170 = vmatprep.subr.mxu0 0.0
    %171 = vmatpush1.msra.mxu0 %v137
    %172 = vmatprep.subr.mxu0 0.0
    %173 = vmatpush1.msra.mxu0 %v138
    %174 = vmatprep.subr.mxu0 0.0
    %175 = vmatpush1.msra.mxu0 %v139
    %176 = vmatprep.subr.mxu0 0.0
    %177 = vmatpush1.msra.mxu0 %v140
    %178 = vmatprep.subr.mxu0 0.0
    %179 = vmatpush1.msra.mxu0 %v141
    %180 = vmatprep.subr.mxu0 0.0
    %181 = vmatpush1.msra.mxu0 %v142
    %182 = vmatprep.subr.mxu0 0.0
    %183 = vmatpush1.msra.mxu0 0.0
    %184 = vmatprep.subr.mxu0 0.0
    %185 = vmatpush1.msra.mxu0 0.0
    %186 = vmatprep.subr.mxu0 0.0
    %187 = vmatpush1.msra.mxu0 0.0
    %188 = vmatprep.subr.mxu0 0.0
    %189 = vmatpush1.msra.mxu0 0.0
    %190 = vmatprep.subr.mxu0 0.0
    %191 = vmatpush1.msra.mxu0 0.0
    %192 = vmatprep.subr.mxu0 0.0
    %193 = vmatpush1.msra.mxu0 0.0
    %194 = vmatprep.subr.mxu0 0.0
    %195 = vmatpush1.msra.mxu0 0.0
    %196 = vmatprep.subr.mxu0 0.0
    %197 = vmatpush1.msra.mxu0 0.0
    %198 = vmatprep.subr.mxu0 0.0
    %199 = vmatpush1.msra.mxu0 0.0
    %200 = vmatprep.subr.mxu0 0.0
    %201 = vmatpush1.msra.mxu0 0.0
    %202 = vmatprep.subr.mxu0 0.0
    %203 = vmatpush1.msra.mxu0 0.0
    %204 = vmatprep.subr.mxu0 0.0
    %205 = vmatpush1.msra.mxu0 0.0
    %206 = vmatprep.subr.mxu0 0.0
    %207 = vmatpush1.msra.mxu0 0.0
    %208 = vmatprep.subr.mxu0 0.0
    %209 = vmatpush1.msra.mxu0 0.0
    %210 = vmatprep.subr.mxu0 0.0
    %211 = vmatpush1.msra.mxu0 0.0
    %212 = vmatprep.subr.mxu0 0.0
    %213 = vmatpush1.msra.mxu0 0.0
    %214 = vmatprep.mubr.f32.mxu0 0.0
    %215 = vmatmul.mubr.f32.gmra.mrb[0].mxu0 %v126
    %v216 = vpop.f32.mrb[0].mxu0
    %v217 = vadd.f32 %v148, %v216
    %v218 = vpop.f32.mrb[0].mxu0
    %219 = vdwg.mxu0
    %v220 = vmax.f32 %v217, 0.0
    %v221 = vld [vmem:[#allocation10] sm:$0xff]
    %v222 = vld [vmem:[#allocation10 + $0x8] sm:$0xff]
    %v223 = vld [vmem:[#allocation10 + $0x10] sm:$0xff]
    %v224 = vld [vmem:[#allocation10 + $0x18] sm:$0xff]
    %v225 = vld [vmem:[#allocation10 + $0x20] sm:$0xff]
    %v226 = vld [vmem:[#allocation10 + $0x28] sm:$0xff]
    %v227 = vld [vmem:[#allocation10 + $0x30] sm:$0xff]
    %v228 = vld [vmem:[#allocation10 + $0x38] sm:$0xff]
    %v229 = vld [vmem:[#allocation10 + $0x40] sm:$0xff]
    %v230 = vld [vmem:[#allocation10 + $0x48] sm:$0xff]
    %v231 = vld [vmem:[#allocation10 + $0x50] sm:$0xff]
    %v232 = vld [vmem:[#allocation10 + $0x58] sm:$0xff]
    %v233 = vld [vmem:[#allocation10 + $0x60] sm:$0xff]
    %v234 = vld [vmem:[#allocation10 + $0x68] sm:$0xff]
    %v235 = vld [vmem:[#allocation10 + $0x70] sm:$0xff]
    %v236 = vld [vmem:[#allocation10 + $0x78] sm:$0xff]
    %v237 = vld [vmem:[%s5] sm:$0x1]
    %v239 = vlaneseq
    %v240 = vshrl.u32 %v239, 7
    %v241 = vsub.s32 0, %v240
    %v242 = vrot.slane %v237, %v241
    %244 = vmatprep.subr.mxu0 0.0
    %245 = vmatpush1.msra.mxu0 %v221
    %246 = vmatprep.subr.mxu0 0.0
    %247 = vmatpush1.msra.mxu0 %v222
    %248 = vmatprep.subr.mxu0 0.0
    %249 = vmatpush1.msra.mxu0 %v223
    %250 = vmatprep.subr.mxu0 0.0
    %251 = vmatpush1.msra.mxu0 %v224
    %252 = vmatprep.subr.mxu0 0.0
    %253 = vmatpush1.msra.mxu0 %v225
    %254 = vmatprep.subr.mxu0 0.0
    %255 = vmatpush1.msra.mxu0 %v226
    %256 = vmatprep.subr.mxu0 0.0
    %257 = vmatpush1.msra.mxu0 %v227
    %258 = vmatprep.subr.mxu0 0.0
    %259 = vmatpush1.msra.mxu0 %v228
    %260 = vmatprep.subr.mxu0 0.0
    %261 = vmatpush1.msra.mxu0 %v229
    %262 = vmatprep.subr.mxu0 0.0
    %263 = vmatpush1.msra.mxu0 %v230
    %264 = vmatprep.subr.mxu0 0.0
    %265 = vmatpush1.msra.mxu0 %v231
    %266 = vmatprep.subr.mxu0 0.0
    %267 = vmatpush1.msra.mxu0 %v232
    %268 = vmatprep.subr.mxu0 0.0
    %269 = vmatpush1.msra.mxu0 %v233
    %270 = vmatprep.subr.mxu0 0.0
    %271 = vmatpush1.msra.mxu0 %v234
    %272 = vmatprep.subr.mxu0 0.0
    %273 = vmatpush1.msra.mxu0 %v235
    %274 = vmatprep.subr.mxu0 0.0
    %275 = vmatpush1.msra.mxu0 %v236
    %276 = vmatprep.subr.mxu0 0.0
    %277 = vmatpush1.msra.mxu0 0.0
    %278 = vmatprep.subr.mxu0 0.0
    %279 = vmatpush1.msra.mxu0 0.0
    %280 = vmatprep.subr.mxu0 0.0
    %281 = vmatpush1.msra.mxu0 0.0
    %282 = vmatprep.subr.mxu0 0.0
    %283 = vmatpush1.msra.mxu0 0.0
    %284 = vmatprep.subr.mxu0 0.0
    %285 = vmatpush1.msra.mxu0 0.0
    %286 = vmatprep.subr.mxu0 0.0
    %287 = vmatpush1.msra.mxu0 0.0
    %288 = vmatprep.subr.mxu0 0.0
    %289 = vmatpush1.msra.mxu0 0.0
    %290 = vmatprep.subr.mxu0 0.0
    %291 = vmatpush1.msra.mxu0 0.0
    %292 = vmatprep.subr.mxu0 0.0
    %293 = vmatpush1.msra.mxu0 0.0
    %294 = vmatprep.subr.mxu0 0.0
    %295 = vmatpush1.msra.mxu0 0.0
    %296 = vmatprep.subr.mxu0 0.0
    %297 = vmatpush1.msra.mxu0 0.0
    %298 = vmatprep.subr.mxu0 0.0
    %299 = vmatpush1.msra.mxu0 0.0
    %300 = vmatprep.subr.mxu0 0.0
    %301 = vmatpush1.msra.mxu0 0.0
    %302 = vmatprep.subr.mxu0 0.0
    %303 = vmatpush1.msra.mxu0 0.0
    %304 = vmatprep.subr.mxu0 0.0
    %305 = vmatpush1.msra.mxu0 0.0
    %306 = vmatprep.subr.mxu0 0.0
    %307 = vmatpush1.msra.mxu0 0.0
    %308 = vmatprep.mubr.f32.mxu0 0.0
    %309 = vmatmul.mubr.f32.gmra.mrb[0].mxu0 %v220
    %v310 = vpop.f32.mrb[0].mxu0
    %v311 = vadd.f32 %v242, %v310
    %v312 = vpop.f32.mrb[0].mxu0
    %313 = vdwg.mxu0
    %v314 = vlaneseq
    %v315 = vand.u32 %v314, 127
    %vm316 = vcmp.lt.s32.totalorder %v315, 2
    %v317 = vsel %vm316, %v311, -1e+30
    %318 = vmax.xlane.f32.xlu0 %v317
    %v319 = vpop.xlane.xlu0 %318
    %v320 = vsub.f32 %v317, %v319
    %v321 = vmul.f32 %v320, 1.442695
    %v322 = vpow.pop %v321
    %v323 = vsel %vm316, %v322, 0.0
    %324 = vadd.xlane.f32.xlu0 %v323
    %v325 = vpop.xlane.xlu0 %324
    %v326 = vlog2.pop %v325
    %v327 = vmul.f32 %v326, 0.6931472
    %v328 = vsub.f32 %v320, %v327
    %329 = vst [vmem:[#allocation11] sm:$0xff] %v328
    // Predicated region
    $region45: #{tpu_custom_call.1} parent=1 // pred_check
      _
    $region46: #{tpu_custom_call.1} parent=1 // pred_check_branch
      %331 = sbr.rel (0) target = $region48
    $region47: #{tpu_custom_call.1} parent=1 // pred_region
      %s333 = ssub.s32 128, 128
      %334 = vsyncadd [#allocation7], %s333
      %s336 = sshll.u32 [#allocation11], 4
      %s337 = int_to_ptr.vmem [resolvable:$true] %s336
      %339 = dma.vmem_to_hbm [thread:$0]  %s337, 128, %s6, [#allocation7]
    $region48: #{tpu_custom_call.1} parent=1 // pred_fallthru
      _
    // Predicated region
    $region49: #{tpu_custom_call.1} parent=1 // pred_check
      _
    $region50: #{tpu_custom_call.1} parent=1 // pred_check_branch
      %341 = sbr.rel (0) target = $region52
    $region51: #{tpu_custom_call.1} parent=1 // pred_region
      %342 = dma.done [#allocation7], 128
    $region52: #{tpu_custom_call.1} parent=1 // pred_fallthru
      _
    %343 = vsyncpa [#allocation6], 1
    %344 = vsyncpa [#allocation9], 1
    %345 = vsyncpa [#allocation7], 1

</llo_original>
